<compile_context>
chip_gen: v7x
topology: tpu7x:2x2x1
jax: 0.10.0
libtpu: 0.0.40
codegen_flags: <defaults>
</compile_context>

<pallas_src>
import functools

import jax
import jax.numpy as jnp
from jax.experimental import pallas as pl
from jax.experimental.pallas import tpu as pltpu


def _round_up(x, m):
    return (x + m - 1) // m * m


def _vmem_capacity_bytes():
    """Physical VMEM of the current chip; conservative 64 MiB (v7x) fallback."""
    try:
        return int(pltpu.get_tpu_info().vmem_capacity_bytes)
    except Exception:  # not on TPU at trace time / API drift
        return 64 * 1024 * 1024


def _vmem_limit_bytes(capacity):
    return int(min(max(capacity * 7 // 10, 32 * 1024 * 1024), 112 * 1024 * 1024))


# ---------------------------------------------------------------------------
# Same-resolution path: flat pixel-tiled CE kernel.
# ---------------------------------------------------------------------------

def _ce_flat_kernel(logits_ref, labels_ref, loss_ref, cnt_ref, *, ignore_label):
    """Masked cross-entropy partial reduction for one (image, pixel-tile) block.

    logits_ref: (1, C, TP)     logits tile: classes on sublanes, pixels on lanes
    labels_ref: (1, 1, TP)     int32 labels tile (padded with ignore_label)
    loss_ref:   (1, 1, 1, 1)   per-(image, tile) partial loss sum
    cnt_ref:    (1, 1, 1, 1)   per-(image, tile) valid-pixel count
    """
    x = logits_ref[0].astype(jnp.float32)          # (C, TP)
    lbl = labels_ref[0]                            # (1, TP) int32

    # Numerically stable log-sum-exp over the class (sublane) axis.
    m = jnp.max(x, axis=0, keepdims=True)                               # (1, TP)
    lse = m + jnp.log(jnp.sum(jnp.exp(x - m), axis=0, keepdims=True))   # (1, TP)

    # Gather the target-class logit with a one-hot select over the class axis.
    # NOTE: labels outside [0, C) that are not ignore_label contribute
    # picked=0 (loss = lse) instead of raising like PyTorch does.
    class_ids = jax.lax.broadcasted_iota(jnp.int32, x.shape, dimension=0)
    picked = jnp.sum(jnp.where(class_ids == lbl, x, 0.0),
                     axis=0, keepdims=True)                             # (1, TP)

    # Labels are padded with ignore_label, so no positional tail mask is needed;
    # jnp.where (not multiply) keeps OOB logits garbage from poisoning the sum.
    valid = lbl != ignore_label                                          # (1, TP)
    loss_vec = jnp.where(valid, lse - picked, 0.0)

    loss_ref[0, 0] = jnp.sum(loss_vec, axis=1, keepdims=True)
    cnt_ref[0, 0] = jnp.sum(valid.astype(jnp.float32), axis=1, keepdims=True)


def _pick_tile_pix(hw, num_classes, logit_itemsize, vmem_budget_bytes, cap=65536):
    """Largest 128-multiple pixel tile whose working set fits the VMEM budget."""
    sub_pack = max(1, 4 // logit_itemsize) * 8        # 8 (f32) / 16 (bf16) sublanes
    c_in = _round_up(num_classes, sub_pack)           # input tile sublane padding
    c_f32 = _round_up(num_classes, 8)
    per_pix = (c_in * logit_itemsize * 2              # double-buffered logits tile
               + c_f32 * 4 * 3                        # f32 elementwise temporaries headroom
               + 8 * 4 * 2)                           # labels row padded to 8 sublanes, dbl-buf
    tp = max(128, (vmem_budget_bytes // per_pix) // 128 * 128)
    return min(tp, cap, max(128, _round_up(hw, 128)))


def _ce_flat_forward(score, target, ignore_label, tile_pix=None):
    N, C, h, w = score.shape
    hw = h * w
    logits = score.reshape(N, C, hw)                   # free reshape, native dtype

    capacity = _vmem_capacity_bytes()
    if tile_pix is None:
        tile_pix = _pick_tile_pix(hw, C, jnp.dtype(score.dtype).itemsize,
                                  capacity // 3)
    tile_pix = max(128, _round_up(int(tile_pix), 128))
    p_tiles = pl.cdiv(hw, tile_pix)
    hw_pad = p_tiles * tile_pix

    # Pad only the (small) labels with ignore_label -> no positional masking.
    labels = jnp.pad(target.reshape(N, 1, hw).astype(jnp.int32),
                     ((0, 0), (0, 0), (0, hw_pad - hw)),
                     constant_values=ignore_label)

    kernel = functools.partial(_ce_flat_kernel, ignore_label=ignore_label)
    loss_part, cnt_part = pl.pallas_call(
        kernel,
        out_shape=(
            jax.ShapeDtypeStruct((N, p_tiles, 1, 1), jnp.float32),
            jax.ShapeDtypeStruct((N, p_tiles, 1, 1), jnp.float32),
        ),
        grid_spec=pltpu.PrefetchScalarGridSpec(
            num_scalar_prefetch=0,
            grid=(N, p_tiles),
            in_specs=[
                pl.BlockSpec((1, C, tile_pix), lambda n, p: (n, 0, p)),
                pl.BlockSpec((1, 1, tile_pix), lambda n, p: (n, 0, p)),
            ],
            out_specs=[
                pl.BlockSpec((1, 1, 1, 1), lambda n, p: (n, p, 0, 0)),
                pl.BlockSpec((1, 1, 1, 1), lambda n, p: (n, p, 0, 0)),
            ],
        ),
        compiler_params=pltpu.CompilerParams(
            dimension_semantics=("parallel", "parallel"),
            vmem_limit_bytes=_vmem_limit_bytes(capacity),
        ),
    )(logits, labels)

    # Mean over non-ignored pixels (PyTorch CrossEntropyLoss reduction='mean').
    # NOTE: returns NaN if every pixel is ignore_label, matching PyTorch.
    return jnp.sum(loss_part) / jnp.sum(cnt_part)


# ---------------------------------------------------------------------------
# Different-resolution path: fused bilinear-upsample + CE kernel.
# ---------------------------------------------------------------------------

def _ce_resize_kernel(score_ref, wr_ref, wct_ref, labels_ref, loss_ref, cnt_ref,
                      *, ignore_label, num_classes):
    """Fused bilinear upsample + cross-entropy for one (image, row-tile) block.

    score_ref:  (1, C, ph, pw)  low-res logits (block index constant over row
                                 tiles -> fetched once per image)
    wr_ref:     (TR, ph)        row-interp weights for this output-row tile
    wct_ref:    (pw, Wp)        transposed column-interp weights (resident)
    labels_ref: (1, TR, Wp)     int32 labels tile (padded with ignore_label)
    loss_ref:   (1, 1, 1, 1)    per-(image, row-tile) partial loss sum
    cnt_ref:    (1, 1, 1, 1)    per-(image, row-tile) valid-pixel count
    """
    wr = wr_ref[...].astype(jnp.float32)           # (TR, ph)
    wct = wct_ref[...].astype(jnp.float32)         # (pw, Wp)
    lbl = labels_ref[0]                            # (TR, Wp) int32
    tr, wp = lbl.shape

    # Flash-style online logsumexp over classes: each class's interpolated
    # logits tile is produced by two small MXU matmuls and folded in, so the
    # full-resolution (C, TR, Wp) tile is never materialized in VMEM or HBM.
    m = jnp.full((tr, wp), -jnp.inf, dtype=jnp.float32)
    s = jnp.zeros((tr, wp), dtype=jnp.float32)
    picked = jnp.zeros((tr, wp), dtype=jnp.float32)
    for c in range(num_classes):                   # static unroll (small C)
        src_c = score_ref[0, c].astype(jnp.float32)                      # (ph, pw)
        rows_c = jnp.dot(wr, src_c, preferred_element_type=jnp.float32)  # (TR, pw)
        x_c = jnp.dot(rows_c, wct, preferred_element_type=jnp.float32)   # (TR, Wp)
        m_new = jnp.maximum(m, x_c)
        s = s * jnp.exp(m - m_new) + jnp.exp(x_c - m_new)
        picked = jnp.where(lbl == c, x_c, picked)
        m = m_new

    lse = m + jnp.log(s)                           # (TR, Wp)
    valid = lbl != ignore_label
    loss_vec = jnp.where(valid, lse - picked, 0.0)

    loss_col = jnp.sum(loss_vec, axis=0, keepdims=True)                  # (1, Wp)
    cnt_col = jnp.sum(valid.astype(jnp.float32), axis=0, keepdims=True)  # (1, Wp)
    loss_ref[0, 0] = jnp.sum(loss_col, axis=1, keepdims=True)
    cnt_ref[0, 0] = jnp.sum(cnt_col, axis=1, keepdims=True)


def _linear_resize_matrix(src_size, dst_size):
    """(dst, src) matrix W s.t. out = W @ src along that axis, with exactly
    jax.image.resize's bilinear (half-pixel, align_corners=False) weights."""
    eye = jnp.eye(src_size, dtype=jnp.float32)
    return jax.image.resize(eye, (dst_size, src_size), method="bilinear")


def _pick_tile_rows(h, w_pad, num_classes, ph, pw, itemsize, budget, cap=256):
    """Largest 8-multiple output-row tile whose working set fits the budget."""
    sub_pack = max(1, 4 // itemsize) * 8
    c_in = _round_up(num_classes, sub_pack)
    fixed = (2 * c_in * _round_up(ph, 8) * _round_up(pw, 128) * itemsize  # score (dbl-buf)
             + 2 * _round_up(pw, 8) * w_pad * 4)                          # wct (dbl-buf)
    per_row = (2 * w_pad * 4                      # labels (int32), dbl-buffered
               + 2 * _round_up(ph, 128) * 4       # row-weights tile, dbl-buffered
               + _round_up(pw, 128) * 4           # per-class row-interp intermediate
               + 8 * w_pad * 4)                   # online-loop live f32 tiles + temps
    avail = max(budget - fixed, 0)
    tr = max(8, (avail // per_row) // 8 * 8)
    return min(tr, cap, _round_up(h, 8))


def _ce_resize_forward(score, target, ignore_label, tile_rows=None):
    N, C, ph, pw = score.shape
    _, h, w = target.shape

    capacity = _vmem_capacity_bytes()
    budget = capacity // 3
    w_pad = _round_up(w, 128)
    itemsize = jnp.dtype(score.dtype).itemsize

    if tile_rows is None:
        tile_rows = _pick_tile_rows(h, w_pad, C, ph, pw, itemsize, budget)
    tile_rows = max(8, _round_up(int(tile_rows), 8))
    h_pad = _round_up(h, tile_rows)
    r_tiles = h_pad // tile_rows

    # Interp weight matrices (small); rows/cols beyond (h, w) are zero weights.
    w_r = jnp.pad(_linear_resize_matrix(ph, h), ((0, h_pad - h), (0, 0)))   # (h_pad, ph)
    w_c_t = jnp.pad(_linear_resize_matrix(pw, w).T, ((0, 0), (0, w_pad - w)))  # (pw, w_pad)

    # Pad only the (small) labels with ignore_label -> padded pixels excluded.
    labels = jnp.pad(target.astype(jnp.int32),
                     ((0, 0), (0, h_pad - h), (0, w_pad - w)),
                     constant_values=ignore_label)

    kernel = functools.partial(_ce_resize_kernel, ignore_label=ignore_label,
                               num_classes=C)
    loss_part, cnt_part = pl.pallas_call(
        kernel,
        out_shape=(
            jax.ShapeDtypeStruct((N, r_tiles, 1, 1), jnp.float32),
            jax.ShapeDtypeStruct((N, r_tiles, 1, 1), jnp.float32),
        ),
        grid_spec=pltpu.PrefetchScalarGridSpec(
            num_scalar_prefetch=0,
            grid=(N, r_tiles),
            in_specs=[
                pl.BlockSpec((1, C, ph, pw), lambda n, r: (n, 0, 0, 0)),
                pl.BlockSpec((tile_rows, ph), lambda n, r: (r, 0)),
                pl.BlockSpec((pw, w_pad), lambda n, r: (0, 0)),
                pl.BlockSpec((1, tile_rows, w_pad), lambda n, r: (n, r, 0)),
            ],
            out_specs=[
                pl.BlockSpec((1, 1, 1, 1), lambda n, r: (n, r, 0, 0)),
                pl.BlockSpec((1, 1, 1, 1), lambda n, r: (n, r, 0, 0)),
            ],
        ),
        compiler_params=pltpu.CompilerParams(
            dimension_semantics=("parallel", "parallel"),
            vmem_limit_bytes=_vmem_limit_bytes(capacity),
        ),
    )(score, w_r, w_c_t, labels)

    return jnp.sum(loss_part) / jnp.sum(cnt_part)


# ---------------------------------------------------------------------------
# Public entry point (equivalent of CrossEntropy.forward with weight=None).
# ---------------------------------------------------------------------------

def cross_entropy_forward(score, target, ignore_label=-1, tile_pix=None,
                          tile_rows=None):
    N, C, ph, pw = score.shape
    _, h, w = target.shape

    if (ph, pw) == (h, w):
        return _ce_flat_forward(score, target, ignore_label, tile_pix)

    capacity = _vmem_capacity_bytes()
    itemsize = jnp.dtype(score.dtype).itemsize
    src_block_bytes = (2 * _round_up(C, 8) * _round_up(ph, 8)
                       * _round_up(pw, 128) * itemsize)
    if ph * pw >= h * w or src_block_bytes > capacity // 2 or C > 256:
        # Downscaling, a low-res map too big to keep VMEM-resident, or a very
        # large class count: fall back to XLA resize + the flat CE kernel.
        # TODO(synk): window the source DMA instead of falling back.
        score = jax.image.resize(score, (N, C, h, w), method="bilinear")
        return _ce_flat_forward(score, target, ignore_label, tile_pix)

    return _ce_resize_forward(score, target, ignore_label, tile_rows)


def _reference_loss(score, target, ignore_label=-1):
    """Pure-JAX reference (same math) for a sanity check."""
    N, C, ph, pw = score.shape
    _, h, w = target.shape
    if (ph, pw) != (h, w):
        score = jax.image.resize(score, (N, C, h, w), method="bilinear")
    logits = jnp.transpose(score, (0, 2, 3, 1)).reshape(-1, C).astype(jnp.float32)
    labels = target.reshape(-1).astype(jnp.int32)
    lse = jax.scipy.special.logsumexp(logits, axis=-1)
    picked = jnp.take_along_axis(
        logits, jnp.clip(labels, 0, C - 1)[:, None], axis=-1)[:, 0]
    valid = (labels != ignore_label).astype(jnp.float32)
    return jnp.sum(valid * (lse - picked)) / jnp.sum(valid)


if __name__ == "__main__":
    key = jax.random.PRNGKey(0)
    k1, k2, k3 = jax.random.split(key, 3)

    N, C, H, W = 2, 4, 16, 16
    score = jax.random.normal(k1, (N, C, H, W), dtype=jnp.float32)
    # labels in [-1, C): -1 is the ignore label
    target = jax.random.randint(k2, (N, H, W), -1, C, dtype=jnp.int32)
    ref = _reference_loss(score, target, ignore_label=-1)

    # Same-resolution path; force 2 pixel tiles to exercise the per-tile-partial
    # (both-axes-parallel) structure, then the default tile size.
    loss = jax.block_until_ready(
        cross_entropy_forward(score, target, ignore_label=-1, tile_pix=128))
    assert jnp.allclose(loss, ref, rtol=1e-5, atol=1e-5), (loss, ref)
    loss_d = jax.block_until_ready(
        cross_entropy_forward(score, target, ignore_label=-1))
    assert jnp.allclose(loss_d, ref, rtol=1e-5, atol=1e-5), (loss_d, ref)

    # Fused bilinear-upsample path (score at half resolution): multi row-tile,
    # then the default row tile.
    score_small = jax.random.normal(k3, (N, C, H // 2, W // 2), dtype=jnp.float32)
    ref2 = _reference_loss(score_small, target, ignore_label=-1)
    loss2 = jax.block_until_ready(
        cross_entropy_forward(score_small, target, ignore_label=-1, tile_rows=8))
    assert jnp.allclose(loss2, ref2, rtol=1e-4, atol=1e-4), (loss2, ref2)
    loss3 = jax.block_until_ready(
        cross_entropy_forward(score_small, target, ignore_label=-1))
    assert jnp.allclose(loss3, ref2, rtol=1e-4, atol=1e-4), (loss3, ref2)

    print("KERNEL_OK")
</pallas_src>

<mosaic_0001>
module attributes {stable_mosaic.version = 11 : i64} {
  func.func @_ce_flat_kernel(%arg0: i32, %arg1: i32, %arg2: memref<1x4x128xf32, #tpu.memory_space<vmem>>, %arg3: memref<1x1x128xi32, #tpu.memory_space<vmem>>, %arg4: memref<1x1x1x1xf32, #tpu.memory_space<vmem>>, %arg5: memref<1x1x1x1xf32, #tpu.memory_space<vmem>>) attributes {dimension_semantics = [#tpu.dimension_semantics<parallel>, #tpu.dimension_semantics<parallel>], iteration_bounds = array<i64: 2, 2>, scalar_prefetch = 0 : i64, scratch_operands = 0 : i64, tpu.core_type = #tpu.core_type<tc>, window_params = [{transform_indices = @transform_0, window_bounds = array<i64: 1, 4, 128>}, {transform_indices = @transform_1, window_bounds = array<i64: 1, 1, 128>}, {transform_indices = @transform_2, window_bounds = array<i64: 1, 1, 1, 1>}, {transform_indices = @transform_3, window_bounds = array<i64: 1, 1, 1, 1>}]} {
    %c0 = arith.constant 0 : index
    %c0_0 = arith.constant 0 : index
    %c0_1 = arith.constant 0 : index
    %0 = vector.load %arg2[%c0, %c0_0, %c0_1] : memref<1x4x128xf32, #tpu.memory_space<vmem>>, vector<1x4x128xf32>
    %1 = vector.shape_cast %0 : vector<1x4x128xf32> to vector<4x128xf32>
    %c0_2 = arith.constant 0 : index
    %c0_3 = arith.constant 0 : index
    %c0_4 = arith.constant 0 : index
    %2 = vector.load %arg3[%c0_2, %c0_3, %c0_4] : memref<1x1x128xi32, #tpu.memory_space<vmem>>, vector<1x1x128xi32>
    %3 = vector.shape_cast %2 : vector<1x1x128xi32> to vector<1x128xi32>
    %cst = arith.constant dense<0xFF800000> : vector<128xf32>
    %4 = vector.multi_reduction <maximumf>, %1, %cst [0] : vector<4x128xf32> to vector<128xf32>
    %5 = vector.shape_cast %4 : vector<128xf32> to vector<1x128xf32>
    %6 = vector.broadcast %5 : vector<1x128xf32> to vector<4x128xf32>
    %7 = arith.subf %1, %6 : vector<4x128xf32>
    %8 = math.exp %7 : vector<4x128xf32>
    %cst_5 = arith.constant dense<0.000000e+00> : vector<128xf32>
    %9 = vector.multi_reduction <add>, %8, %cst_5 [0] : vector<4x128xf32> to vector<128xf32>
    %10 = vector.shape_cast %9 : vector<128xf32> to vector<1x128xf32>
    %11 = math.log %10 : vector<1x128xf32>
    %12 = arith.addf %5, %11 : vector<1x128xf32>
    %13 = tpu.iota {dimensions = array<i32: 0>} : vector<4x128xi32>
    %14 = vector.broadcast %3 : vector<1x128xi32> to vector<4x128xi32>
    %15 = arith.cmpi eq, %13, %14 : vector<4x128xi32>
    %cst_6 = arith.constant 0.000000e+00 : f32
    %16 = vector.broadcast %cst_6 : f32 to vector<4x128xf32>
    %17 = arith.select %15, %1, %16 : vector<4x128xi1>, vector<4x128xf32>
    %cst_7 = arith.constant dense<0.000000e+00> : vector<128xf32>
    %18 = vector.multi_reduction <add>, %17, %cst_7 [0] : vector<4x128xf32> to vector<128xf32>
    %19 = vector.shape_cast %18 : vector<128xf32> to vector<1x128xf32>
    %c-1_i32 = arith.constant -1 : i32
    %20 = vector.broadcast %c-1_i32 : i32 to vector<1x128xi32>
    %21 = arith.cmpi ne, %3, %20 : vector<1x128xi32>
    %22 = arith.subf %12, %19 : vector<1x128xf32>
    %cst_8 = arith.constant 0.000000e+00 : f32
    %23 = vector.broadcast %cst_8 : f32 to vector<1x128xf32>
    %24 = arith.select %21, %22, %23 : vector<1x128xi1>, vector<1x128xf32>
    %cst_9 = arith.constant dense<0.000000e+00> : vector<1xf32>
    %25 = vector.multi_reduction <add>, %24, %cst_9 [1] : vector<1x128xf32> to vector<1xf32>
    %26 = vector.shape_cast %25 : vector<1xf32> to vector<1x1xf32>
    %c0_10 = arith.constant 0 : index
    %c0_11 = arith.constant 0 : index
    %c0_12 = arith.constant 0 : index
    %c0_13 = arith.constant 0 : index
    %27 = vector.load %arg4[%c0_10, %c0_11, %c0_12, %c0_13] : memref<1x1x1x1xf32, #tpu.memory_space<vmem>>, vector<1x1x1x1xf32>
    %28 = vector.shape_cast %27 : vector<1x1x1x1xf32> to vector<1x1xf32>
    %29 = vector.shape_cast %26 : vector<1x1xf32> to vector<1x1x1x1xf32>
    tpu.vector_store %arg4[%c0_10, %c0_11, %c0_12, %c0_13], %29 {strides = array<i32>} : memref<1x1x1x1xf32, #tpu.memory_space<vmem>>, vector<1x1x1x1xf32>,
    %30 = arith.extui %21 : vector<1x128xi1> to vector<1x128xi32>
    %31 = arith.sitofp %30 : vector<1x128xi32> to vector<1x128xf32>
    %cst_14 = arith.constant dense<0.000000e+00> : vector<1xf32>
    %32 = vector.multi_reduction <add>, %31, %cst_14 [1] : vector<1x128xf32> to vector<1xf32>
    %33 = vector.shape_cast %32 : vector<1xf32> to vector<1x1xf32>
    %c0_15 = arith.constant 0 : index
    %c0_16 = arith.constant 0 : index
    %c0_17 = arith.constant 0 : index
    %c0_18 = arith.constant 0 : index
    %34 = vector.load %arg5[%c0_15, %c0_16, %c0_17, %c0_18] : memref<1x1x1x1xf32, #tpu.memory_space<vmem>>, vector<1x1x1x1xf32>
    %35 = vector.shape_cast %34 : vector<1x1x1x1xf32> to vector<1x1xf32>
    %36 = vector.shape_cast %33 : vector<1x1xf32> to vector<1x1x1x1xf32>
    tpu.vector_store %arg5[%c0_15, %c0_16, %c0_17, %c0_18], %36 {strides = array<i32>} : memref<1x1x1x1xf32, #tpu.memory_space<vmem>>, vector<1x1x1x1xf32>,
    return
  }
  func.func @transform_0(%arg0: i32, %arg1: i32) -> (i32, i32, i32) {
    %c0_i32 = arith.constant 0 : i32
    %c0_i32_0 = arith.constant 0 : i32
    return %arg0, %c0_i32, %arg1 : i32, i32, i32
  }
  func.func @transform_1(%arg0: i32, %arg1: i32) -> (i32, i32, i32) {
    %c0_i32 = arith.constant 0 : i32
    %c0_i32_0 = arith.constant 0 : i32
    return %arg0, %c0_i32, %arg1 : i32, i32, i32
  }
  func.func @transform_2(%arg0: i32, %arg1: i32) -> (i32, i32, i32, i32) {
    %c0_i32 = arith.constant 0 : i32
    %c0_i32_0 = arith.constant 0 : i32
    %c0_i32_1 = arith.constant 0 : i32
    return %arg0, %arg1, %c0_i32, %c0_i32_0 : i32, i32, i32, i32
  }
  func.func @transform_3(%arg0: i32, %arg1: i32) -> (i32, i32, i32, i32) {
    %c0_i32 = arith.constant 0 : i32
    %c0_i32_0 = arith.constant 0 : i32
    %c0_i32_1 = arith.constant 0 : i32
    return %arg0, %arg1, %c0_i32, %c0_i32_0 : i32, i32, i32, i32
  }
}

</mosaic_0001>

<llo_original>
// kernel: tpu_custom_call.1
$region0: #{tpu_custom_call.1}
  #allocation0 [shape = 'u32[]', space=smem, size = 0x4, offset = 0x4, fixed_abs, tag = 'smem constant byte address 0x4 - core index']
  #allocation1 [shape = 'u32[144,128]{1,0:T(1,128)}', space=vmem, size = 0x12000, scoped, tag = 'internal scratch']
  %s0 = inlined_call_operand.hbm [shape: f32[2,4,256], index: 0, kind: input, shape index: {}]
  %s1 = inlined_call_operand.hbm [shape: s32[2,1,256], index: 1, kind: input, shape index: {}]
  %s2 = inlined_call_operand.vmem [shape: f32[2,2,1,1], index: 2, kind: output, shape index: {0}]
  %s3 = inlined_call_operand.vmem [shape: f32[2,2,1,1], index: 3, kind: output, shape index: {1}]
  %4 = xla_tuple %s2, %s3
  %s5 = sld [smem:[#allocation0]]
  $region57: #{tpu_custom_call.1} parent=0
    _
  %s7 = ssub.s32 1, %s5
  %s8 = scalar_select 0, %s7, %s5
  $region1: #{tpu_custom_call.1} parent=0
    #allocation2 [shape = 'u8[4096]{0}', space=vmem, size = 0x1000, scoped, tag = 'input window, operand 0']
    #allocation3 [shape = 's32[2]{0}', space=sflag, size = 0x8, scoped, tag = 'scoped memory for tpu_custom_call.1']
    #allocation4 [shape = 'u8[1024]{0}', space=vmem, size = 0x400, scoped, tag = 'input window, operand 1']
    #allocation5 [shape = 's32[2]{0}', space=sflag, size = 0x8, scoped, tag = 'scoped memory for tpu_custom_call.1']
    %9 = vsyncpa [#allocation3], 0
    %s10 = scalar_lea.sflag [#allocation3], 1
    %11 = vsyncpa %s10, 0
    %12 = vsyncpa [#allocation5], 0
    %s13 = scalar_lea.sflag [#allocation5], 1
    %14 = vsyncpa %s13, 0
    loop: start=0, step=1, limit=6
    $region2: #{tpu_custom_call.1} parent=1 // loop_pre_header
      _
    $region3: #{tpu_custom_call.1} parent=1 // loop_header
      %s16 = sphi 0, %s20
      %p17 = scmp.ge.s32.totalorder %s16, 6
      %s23 = sphi 0, %s35
      %s24 = sphi 0, %s31
      %s25 = sphi 0, %s23
      %s26 = sphi 0, %s24
      %s27 = sphi 0, %s25
      %s28 = sphi 0, %s26
      %s40 = sphi 0, %s42
      %s43 = sphi 0, %s40
      %s44 = sphi 0, %s43
      %s60 = sphi 0, %s44
      %s68 = sphi 0, %s70
      %s71 = sphi 0, %s68
      %s72 = sphi 0, %s71
      %s88 = sphi 0, %s72
      %s96 = sphi 0, %s98
      %s99 = sphi 0, %s96
      %s100 = sphi 0, %s99
      %s116 = sphi 0, %s100
      %s124 = sphi 0, %s126
      %s127 = sphi 0, %s124
      %s128 = sphi 0, %s127
      %s144 = sphi 0, %s128
    $region4: #{tpu_custom_call.1} parent=1 // loop_header_branch
      %19 = sbr.rel (%p17) target = $region8
    $region5: #{tpu_custom_call.1} parent=1 // loop_body
      %s21 = ssub.s32 %s16, 1
      %s22 = ssub.s32 %s16, 2
      %s29 = sadd.s32 1, %s24
      %p30 = scmp.ge.s32.totalorder %s29, 2
      %s31 = scalar_select %p30, 0, %s29
      %s32 = sadd.s32 1, %s23
      %s33 = scalar_select %p30, %s32, %s23
      %p34 = scmp.ge.s32.totalorder %s33, 2
      %s35 = scalar_select %p34, 0, %s33
      %s36 = ssub.s32 %s23, %s35
      %s37 = ssub.s32 %s24, %s31
      %s38 = sor.u32 %s36, %s37
      %p39 = scmp.eq.s32.totalorder %s38, 0
      %s41 = sadd.s32 %s40, 1
      %s42 = scalar_select %p39, %s40, %s41
      %p45 = pneg %p39
      %p46 = scmp.eq.s32.totalorder %s16, 3
      %p47 = por %p45, %p46
      %p48 = scmp.ne.s32.totalorder %s40, %s43
      %p49 = scmp.eq.s32.totalorder %s16, 0
      %p50 = por %p48, %p49
      %p51 = scmp.ne.s32.totalorder %s40, %s43
      %p52 = scmp.eq.s32.totalorder %s21, 3
      %p53 = por %p51, %p52
      %p54 = scmp.ne.s32.totalorder %s43, %s44
      %p55 = scmp.eq.s32.totalorder %s21, 0
      %p56 = por %p54, %p55
      %p57 = scmp.ne.s32.totalorder %s43, %s44
      %p58 = scmp.eq.s32.totalorder %s22, 3
      %p59 = por %p57, %p58
      %p61 = scmp.ne.s32.totalorder %s44, %s60
      %p62 = scmp.eq.s32.totalorder %s22, 0
      %p63 = por %p61, %p62
      %s64 = ssub.s32 %s23, %s35
      %s65 = ssub.s32 %s24, %s31
      %s66 = sor.u32 %s64, %s65
      %p67 = scmp.eq.s32.totalorder %s66, 0
      %s69 = sadd.s32 %s68, 1
      %s70 = scalar_select %p67, %s68, %s69
      %p73 = pneg %p67
      %p74 = scmp.eq.s32.totalorder %s16, 3
      %p75 = por %p73, %p74
      %p76 = scmp.ne.s32.totalorder %s68, %s71
      %p77 = scmp.eq.s32.totalorder %s16, 0
      %p78 = por %p76, %p77
      %p79 = scmp.ne.s32.totalorder %s68, %s71
      %p80 = scmp.eq.s32.totalorder %s21, 3
      %p81 = por %p79, %p80
      %p82 = scmp.ne.s32.totalorder %s71, %s72
      %p83 = scmp.eq.s32.totalorder %s21, 0
      %p84 = por %p82, %p83
      %p85 = scmp.ne.s32.totalorder %s71, %s72
      %p86 = scmp.eq.s32.totalorder %s22, 3
      %p87 = por %p85, %p86
      %p89 = scmp.ne.s32.totalorder %s72, %s88
      %p90 = scmp.eq.s32.totalorder %s22, 0
      %p91 = por %p89, %p90
      %s92 = ssub.s32 %s23, %s35
      %s93 = ssub.s32 %s24, %s31
      %s94 = sor.u32 %s92, %s93
      %p95 = scmp.eq.s32.totalorder %s94, 0
      %s97 = sadd.s32 %s96, 1
      %s98 = scalar_select %p95, %s96, %s97
      %p101 = pneg %p95
      %p102 = scmp.eq.s32.totalorder %s16, 3
      %p103 = por %p101, %p102
      %p104 = scmp.ne.s32.totalorder %s96, %s99
      %p105 = scmp.eq.s32.totalorder %s16, 0
      %p106 = por %p104, %p105
      %p107 = scmp.ne.s32.totalorder %s96, %s99
      %p108 = scmp.eq.s32.totalorder %s21, 3
      %p109 = por %p107, %p108
      %p110 = scmp.ne.s32.totalorder %s99, %s100
      %p111 = scmp.eq.s32.totalorder %s21, 0
      %p112 = por %p110, %p111
      %p113 = scmp.ne.s32.totalorder %s99, %s100
      %p114 = scmp.eq.s32.totalorder %s22, 3
      %p115 = por %p113, %p114
      %p117 = scmp.ne.s32.totalorder %s100, %s116
      %p118 = scmp.eq.s32.totalorder %s22, 0
      %p119 = por %p117, %p118
      %s120 = ssub.s32 %s23, %s35
      %s121 = ssub.s32 %s24, %s31
      %s122 = sor.u32 %s120, %s121
      %p123 = scmp.eq.s32.totalorder %s122, 0
      %s125 = sadd.s32 %s124, 1
      %s126 = scalar_select %p123, %s124, %s125
      %p129 = pneg %p123
      %p130 = scmp.eq.s32.totalorder %s16, 3
      %p131 = por %p129, %p130
      %p132 = scmp.ne.s32.totalorder %s124, %s127
      %p133 = scmp.eq.s32.totalorder %s16, 0
      %p134 = por %p132, %p133
      %p135 = scmp.ne.s32.totalorder %s124, %s127
      %p136 = scmp.eq.s32.totalorder %s21, 3
      %p137 = por %p135, %p136
      %p138 = scmp.ne.s32.totalorder %s127, %s128
      %p139 = scmp.eq.s32.totalorder %s21, 0
      %p140 = por %p138, %p139
      %p141 = scmp.ne.s32.totalorder %s127, %s128
      %p142 = scmp.eq.s32.totalorder %s22, 3
      %p143 = por %p141, %p142
      %p145 = scmp.ne.s32.totalorder %s128, %s144
      %p146 = scmp.eq.s32.totalorder %s22, 0
      %p147 = por %p145, %p146
      %p148 = scmp.le.s32.totalorder 1, %s16
      %p149 = scmp.lt.s32.totalorder %s16, 5
      %p150 = pnand %p148, %p149
      %p151 = pneg %p150
      // Predicated region
      $region9: #{tpu_custom_call.1} parent=5 // pred_check
        _
      $region10: #{tpu_custom_call.1} parent=5 // pred_check_branch
        %153 = sbr.rel (%p150) target = $region12
      $region11: #{tpu_custom_call.1} parent=5 // pred_region
        %s154 = ssub.s32 %s16, 1
      $region12: #{tpu_custom_call.1} parent=5 // pred_fallthru
        _
      %p155 = scmp.lt.s32.totalorder %s16, 4
      // Predicated region
      $region13: #{tpu_custom_call.1} parent=5 // pred_check
        %p156 = pneg %p155
      $region14: #{tpu_custom_call.1} parent=5 // pred_check_branch
        %158 = sbr.rel (%p156) target = $region16
      $region15: #{tpu_custom_call.1} parent=5 // pred_region
        // Predicated region
        $region17: #{tpu_custom_call.1} parent=15 // pred_check
          %p159 = pneg %p50
        $region18: #{tpu_custom_call.1} parent=15 // pred_check_branch
          %161 = sbr.rel (%p159) target = $region20
        $region19: #{tpu_custom_call.1} parent=15 // pred_region
          %s162 = sand.u32 %s40, 1
          %s163 = scalar_lea.sflag [#allocation3], %s162
          %s164 = sand.u32 %s40, 1
          %s165 = smul.addr %s164, 4
          %s166 = scalar_lea.vmem [#allocation2], %s165
          %s168 = ssub.s32 64, 64
          %169 = vsyncadd %s163, %s168
          %s170 = smul.addr %s23, 2
          %s171 = sadd.s32 %s24, %s170
          %s172 = smul.addr %s171, 64
          %s173 = scalar_lea.hbm %s0, %s172
          %s175 = sshll.u32 %s166, 4
          %s176 = int_to_ptr.vmem [resolvable:$true] %s175
          %178 = dma.hbm_to_vmem [thread:$0]  %s173, 64, %s176, %s163
        $region20: #{tpu_custom_call.1} parent=15 // pred_fallthru
          _
        // Predicated region
        $region21: #{tpu_custom_call.1} parent=15 // pred_check
          %p179 = pneg %p78
        $region22: #{tpu_custom_call.1} parent=15 // pred_check_branch
          %181 = sbr.rel (%p179) target = $region24
        $region23: #{tpu_custom_call.1} parent=15 // pred_region
          %s182 = sand.u32 %s68, 1
          %s183 = scalar_lea.sflag [#allocation5], %s182
          %s184 = sand.u32 %s68, 1
          %s185 = scalar_lea.vmem [#allocation4], %s184
          %s187 = ssub.s32 16, 16
          %188 = vsyncadd %s183, %s187
          %s189 = smul.addr %s23, 2
          %s190 = sadd.s32 %s24, %s189
          %s191 = smul.addr %s190, 16
          %s192 = scalar_lea.hbm %s1, %s191
          %s194 = sshll.u32 %s185, 4
          %s195 = int_to_ptr.vmem [resolvable:$true] %s194
          %197 = dma.hbm_to_vmem [thread:$0]  %s192, 16, %s195, %s183
        $region24: #{tpu_custom_call.1} parent=15 // pred_fallthru
          _
      $region16: #{tpu_custom_call.1} parent=5 // pred_fallthru
        _
      %p198 = scmp.le.s32.totalorder 1, %s16
      %p199 = scmp.lt.s32.totalorder %s16, 5
      %p200 = pnand %p198, %p199
      %p201 = pneg %p200
      // Predicated region
      $region25: #{tpu_custom_call.1} parent=5 // pred_check
        _
      $region26: #{tpu_custom_call.1} parent=5 // pred_check_branch
        %203 = sbr.rel (%p200) target = $region28
      $region27: #{tpu_custom_call.1} parent=5 // pred_region
        %s204 = ssub.s32 %s16, 1
        %s205 = sand.u32 %s43, 1
        %s206 = scalar_lea.sflag [#allocation3], %s205
        %s207 = sand.u32 %s43, 1
        %s208 = smul.addr %s207, 4
        %s209 = scalar_lea.vmem [#allocation2], %s208
        // Predicated region
        $region29: #{tpu_custom_call.1} parent=27 // pred_check
          %p210 = pneg %p56
        $region30: #{tpu_custom_call.1} parent=27 // pred_check_branch
          %212 = sbr.rel (%p210) target = $region32
        $region31: #{tpu_custom_call.1} parent=27 // pred_region
          %213 = dma.done %s206, 64
        $region32: #{tpu_custom_call.1} parent=27 // pred_fallthru
          _
        %s214 = sand.u32 %s71, 1
        %s215 = scalar_lea.sflag [#allocation5], %s214
        %s216 = sand.u32 %s71, 1
        %s217 = scalar_lea.vmem [#allocation4], %s216
        // Predicated region
        $region33: #{tpu_custom_call.1} parent=27 // pred_check
          %p218 = pneg %p84
        $region34: #{tpu_custom_call.1} parent=27 // pred_check_branch
          %220 = sbr.rel (%p218) target = $region36
        $region35: #{tpu_custom_call.1} parent=27 // pred_region
          %221 = dma.done %s215, 16
        $region36: #{tpu_custom_call.1} parent=27 // pred_fallthru
          _
        %s222 = sand.u32 %s43, 1
        %s223 = scalar_lea.sflag [#allocation3], %s222
        %s224 = sand.u32 %s43, 1
        %s225 = smul.addr %s224, 4
        %s226 = scalar_lea.vmem [#allocation2], %s225
        %p227 = pneg %p56
        %p228 = pneg %p53
        %s229 = sand.u32 %s71, 1
        %s230 = scalar_lea.sflag [#allocation5], %s229
        %s231 = sand.u32 %s71, 1
        %s232 = scalar_lea.vmem [#allocation4], %s231
        %p233 = pneg %p84
        %p234 = pneg %p81
        %p235 = pneg %p112
        %p236 = pneg %p109
        %p237 = scmp.lt.s32.totalorder %s25, 1
        %s238 = scalar_select %p237, %s25, 1
        %p239 = scmp.lt.s32.totalorder %s26, 1
        %s240 = scalar_select %p239, %s26, 1
        %s241 = smul.addr %s238, 2
        %s242 = sadd.s32 %s240, %s241
        %s243 = scalar_lea.vmem %s2, %s242
        %p244 = pneg %p140
        %p245 = pneg %p137
        %p246 = scmp.lt.s32.totalorder %s25, 1
        %s247 = scalar_select %p246, %s25, 1
        %p248 = scmp.lt.s32.totalorder %s26, 1
        %s249 = scalar_select %p248, %s26, 1
        %s250 = smul.addr %s247, 2
        %s251 = sadd.s32 %s249, %s250
        %s252 = scalar_lea.vmem %s3, %s251
        %p253 = scmp.lt.s32.totalorder %s25, 1
        %s254 = scalar_select %p253, %s25, 1
        %p255 = scmp.lt.s32.totalorder %s26, 1
        %s256 = scalar_select %p255, %s26, 1
        %s257 = smul.addr %s254, 2
        %s258 = sadd.s32 %s256, %s257
        %s259 = scalar_lea.vmem %s2, %s258
        %p260 = scmp.lt.s32.totalorder %s25, 1
        %s261 = scalar_select %p260, %s25, 1
        %p262 = scmp.lt.s32.totalorder %s26, 1
        %s263 = scalar_select %p262, %s26, 1
        %s264 = smul.addr %s261, 2
        %s265 = sadd.s32 %s263, %s264
        %s266 = scalar_lea.vmem %s3, %s265
        %v267 = vld [vmem:[%s209] sm:$0xf]
        %v268 = vld [vmem:[%s217] sm:$0x1]
        %vm269 = vcmask 1043456
        %v270 = vsel %vm269, %v267, -inf
        %v271 = vrot.slane %v270, 4
        %v272 = vmax.f32 %v270, %v271
        %v273 = vrot.slane %v272, 2
        %v274 = vmax.f32 %v272, %v273
        %v275 = vrot.slane %v274, 1
        %v276 = vmax.f32 %v274, %v275
        %v277 = vsub.f32 %v267, %v276
        %v278 = vmul.f32 %v277, 1.442695
        %v279 = vpow.pop %v278
        %v280 = vsel %vm269, %v279, 0.0
        %v281 = vrot.slane %v280, 4
        %v282 = vadd.f32 %v280, %v281
        %v283 = vrot.slane %v282, 2
        %v284 = vadd.f32 %v282, %v283
        %v285 = vrot.slane %v284, 1
        %v286 = vadd.f32 %v284, %v285
        %v287 = vlog2.pop %v286
        %v288 = vmul.f32 %v287, 0.6931472
        %v289 = vadd.f32 %v276, %v288
        %v290 = vlaneseq
        %v291 = vshrl.u32 %v290, 7
        %v292 = vlaneseq
        %v293 = vshrl.u32 %v292, 7
        %v294 = vsub.s32 0, %v293
        %v295 = vrot.slane %v268, %v294
        %vm296 = vcmp.eq.s32.totalorder %v291, %v295
        %v297 = vsel %vm296, %v267, 0.0
        %v298 = vsel %vm269, %v297, 0.0
        %v299 = vrot.slane %v298, 4
        %v300 = vadd.f32 %v298, %v299
        %v301 = vrot.slane %v300, 2
        %v302 = vadd.f32 %v300, %v301
        %v303 = vrot.slane %v302, 1
        %v304 = vadd.f32 %v302, %v303
        %vm305 = vcmp.ne.s32.totalorder %v268, 4294967295
        %v306 = vsub.f32 %v289, %v304
        %v307 = vsel %vm305, %v306, 0.0
        %vm308 = vcmask 1040384
        %v309 = vsel %vm308, %v307, 0.0
        %310 = vadd.xlane.f32.xlu0 %v309
        %v311 = vpop.xlane.xlu0 %310
        %vm312 = vcmask 0
        %313 = vst.msk [vmem:[%s259] sm:$0x1] %vm312, %v311
        %v314 = vsel %vm305, 1, 0
        %v315 = vcvt.s32.f32 %v314
        %v316 = vsel %vm308, %v315, 0.0
        %317 = vadd.xlane.f32.xlu0 %v316
        %v318 = vpop.xlane.xlu0 %317
        %319 = vst.msk [vmem:[%s266] sm:$0x1] %vm312, %v318
        %p320 = scmp.lt.s32.totalorder %s25, 1
        %s321 = scalar_select %p320, %s25, 1
        %p322 = scmp.lt.s32.totalorder %s26, 1
        %s323 = scalar_select %p322, %s26, 1
        %s324 = smul.addr %s321, 2
        %s325 = sadd.s32 %s323, %s324
        %s326 = scalar_lea.vmem %s2, %s325
        %p327 = scmp.lt.s32.totalorder %s25, 1
        %s328 = scalar_select %p327, %s25, 1
        %p329 = scmp.lt.s32.totalorder %s26, 1
        %s330 = scalar_select %p329, %s26, 1
        %s331 = smul.addr %s328, 2
        %s332 = sadd.s32 %s330, %s331
        %s333 = scalar_lea.vmem %s3, %s332
        // Predicated region
        $region37: #{tpu_custom_call.1} parent=27 // pred_check
          %p334 = pneg %p109
        $region38: #{tpu_custom_call.1} parent=27 // pred_check_branch
          %336 = sbr.rel (%p334) target = $region40
        $region39: #{tpu_custom_call.1} parent=27 // pred_region
          _
        $region40: #{tpu_custom_call.1} parent=27 // pred_fallthru
          _
        // Predicated region
        $region41: #{tpu_custom_call.1} parent=27 // pred_check
          %p337 = pneg %p137
        $region42: #{tpu_custom_call.1} parent=27 // pred_check_branch
          %339 = sbr.rel (%p337) target = $region44
        $region43: #{tpu_custom_call.1} parent=27 // pred_region
          _
        $region44: #{tpu_custom_call.1} parent=27 // pred_fallthru
          _
      $region28: #{tpu_custom_call.1} parent=5 // pred_fallthru
        _
      %p340 = scmp.le.s32.totalorder 2, %s16
      // Predicated region
      $region45: #{tpu_custom_call.1} parent=5 // pred_check
        %p341 = pneg %p340
      $region46: #{tpu_custom_call.1} parent=5 // pred_check_branch
        %343 = sbr.rel (%p341) target = $region48
      $region47: #{tpu_custom_call.1} parent=5 // pred_region
        %s344 = ssub.s32 %s16, 2
        // Predicated region
        $region49: #{tpu_custom_call.1} parent=47 // pred_check
          %p345 = pneg %p115
        $region50: #{tpu_custom_call.1} parent=47 // pred_check_branch
          %347 = sbr.rel (%p345) target = $region52
        $region51: #{tpu_custom_call.1} parent=47 // pred_region
          %p348 = scmp.lt.s32.totalorder %s27, 1
          %s349 = scalar_select %p348, %s27, 1
          %p350 = scmp.lt.s32.totalorder %s28, 1
          %s351 = scalar_select %p350, %s28, 1
          %s352 = smul.addr %s349, 2
          %s353 = sadd.s32 %s351, %s352
          %s354 = scalar_lea.vmem %s2, %s353
        $region52: #{tpu_custom_call.1} parent=47 // pred_fallthru
          _
        // Predicated region
        $region53: #{tpu_custom_call.1} parent=47 // pred_check
          %p355 = pneg %p143
        $region54: #{tpu_custom_call.1} parent=47 // pred_check_branch
          %357 = sbr.rel (%p355) target = $region56
        $region55: #{tpu_custom_call.1} parent=47 // pred_region
          %p358 = scmp.lt.s32.totalorder %s27, 1
          %s359 = scalar_select %p358, %s27, 1
          %p360 = scmp.lt.s32.totalorder %s28, 1
          %s361 = scalar_select %p360, %s28, 1
          %s362 = smul.addr %s359, 2
          %s363 = sadd.s32 %s361, %s362
          %s364 = scalar_lea.vmem %s3, %s363
        $region56: #{tpu_custom_call.1} parent=47 // pred_fallthru
          _
      $region48: #{tpu_custom_call.1} parent=5 // pred_fallthru
        _
    $region6: #{tpu_custom_call.1} parent=1 // loop_footer
      %s20 = sadd.s32 1, %s16
    $region7: #{tpu_custom_call.1} parent=1 // loop_footer_branch
      %15 = sbr.rel target = $region3
    $region8: #{tpu_custom_call.1} parent=1 // loop_exit
      _
    %365 = vsyncpa [#allocation3], 1
    %s366 = scalar_lea.sflag [#allocation3], 1
    %367 = vsyncpa %s366, 1
    %368 = vsyncpa [#allocation5], 1
    %s369 = scalar_lea.sflag [#allocation5], 1
    %370 = vsyncpa %s369, 1

</llo_original>
